<compile_context>
chip_gen: v5e
topology: v5e:2x2
jax: 0.10.0
libtpu: 0.0.40
codegen_flags: <defaults>
</compile_context>

<pallas_src>
import jax
import jax.numpy as jnp
from jax.experimental import pallas as pl
from jax.experimental.pallas import tpu as pltpu


def _mlp_kernel(x_ref, w1_ref, b1_ref, w2_ref, b2_ref, o_ref):
    # Hidden layer: Linear + ReLU (MXU matmul, f32 accumulation).
    h = jnp.dot(x_ref[...], w1_ref[...], preferred_element_type=jnp.float32)
    h = jnp.maximum(h + b1_ref[...], 0.0)                 # [TB,Hp] + [1,Hp]

    # Output layer: Linear + exact sigmoid (h stays f32, W2 is f32).
    y = jnp.dot(h, w2_ref[...], preferred_element_type=jnp.float32)
    y = y + b2_ref[...]                                   # [TB,Do] + [1,Do]
    y = 1.0 / (1.0 + jnp.exp(-y))                         # exp on EUP; exact divide
    o_ref[...] = y.astype(o_ref.dtype)


def _round_up(n, m):
    return ((n + m - 1) // m) * m


def logistic_regression_forward(x, w1, b1, w2, b2, *, batch_tile=4096):
    """x: [B, D_in]; w1: [D_in, H]; b1: [H]; w2: [H, D_out]; b2: [D_out]."""
    B, D_in = x.shape
    H = w1.shape[1]
    D_out = w2.shape[1]
    out_dtype = x.dtype

    # --- pad hidden dim to full lane width (exact; only tiny weights touched) ---
    H_pad = max(_round_up(H, 128), 128)
    if H_pad != H:
        w1 = jnp.zeros((D_in, H_pad), w1.dtype).at[:, :H].set(w1)
        b1 = jnp.zeros((H_pad,), b1.dtype).at[:H].set(b1)
        w2 = jnp.zeros((H_pad, D_out), w2.dtype).at[:H, :].set(w2)
    w1 = w1.astype(x.dtype)                         # match MXU operand dtypes (no-op for f32)
    b1 = b1.astype(jnp.float32).reshape(1, H_pad)
    w2 = w2.astype(jnp.float32)                     # 2nd matmul runs f32 (h is f32)
    b2 = b2.astype(jnp.float32).reshape(1, D_out)

    # --- batch tile selection -------------------------------------------------
    TB = max(8, min(batch_tile, _round_up(B, 8)))
    if B >= 16:
        # Guarantee >= 2 grid steps so the "parallel" axis can shard across
        # v7x's 2 TensorCores and the pipeline has iterations to hide DMA.
        TB = min(TB, _round_up((B + 1) // 2, 8))

    def _step_bytes(tb):
        # Double-buffered x/out tiles + f32 hidden temporaries for one step.
        return (2 * tb * D_in * x.dtype.itemsize
                + 2 * tb * D_out * out_dtype.itemsize
                + 2 * tb * H_pad * 4)

    weight_bytes = 2 * (w1.size * w1.dtype.itemsize        # (double-buffered residents)
                        + w2.size * w2.dtype.itemsize
                        + (H_pad + D_out) * 4)
    VMEM_BUDGET = 40 * 1024 * 1024                          # safe on v5e/v6e/v7x
    while TB > 8 and _step_bytes(TB) + weight_bytes > VMEM_BUDGET:
        TB = max(8, _round_up(TB // 2, 8))

    grid = (pl.cdiv(B, TB),)                                # ragged last block handled by Pallas

    # --- cost estimate: firmly memory-bound -----------------------------------
    flops = 2 * B * D_in * H_pad + 2 * B * H_pad * D_out
    bytes_accessed = (x.size * x.dtype.itemsize
                      + B * D_out * out_dtype.itemsize
                      + w1.size * w1.dtype.itemsize
                      + w2.size * w2.dtype.itemsize
                      + (H_pad + D_out) * 4)
    cost = pl.CostEstimate(flops=flops, transcendentals=B * D_out,
                           bytes_accessed=bytes_accessed)

    out = pl.pallas_call(
        _mlp_kernel,
        out_shape=jax.ShapeDtypeStruct((B, D_out), out_dtype),
        grid=grid,
        in_specs=[
            pl.BlockSpec((TB, D_in), lambda i: (i, 0)),       # x: streamed per batch tile
            pl.BlockSpec((D_in, H_pad), lambda i: (0, 0)),    # W1: VMEM-resident
            pl.BlockSpec((1, H_pad), lambda i: (0, 0)),       # b1: VMEM-resident
            pl.BlockSpec((H_pad, D_out), lambda i: (0, 0)),   # W2: VMEM-resident
            pl.BlockSpec((1, D_out), lambda i: (0, 0)),       # b2: VMEM-resident
        ],
        out_specs=pl.BlockSpec((TB, D_out), lambda i: (i, 0)),  # true width, no padding
        compiler_params=pltpu.CompilerParams(
            dimension_semantics=("parallel",),     # batch tiles shard over v7x's 2 TCs
            vmem_limit_bytes=48 * 1024 * 1024,     # <= v7x per-TC VMEM, plenty on v5e/v6e
        ),
        cost_estimate=cost,
    )(x, w1, b1, w2, b2)

    return out


if __name__ == "__main__":
    # Shapes implied by the module: Linear(input_dim, hidden_dim) -> ReLU ->
    # Linear(hidden_dim, output_dim) -> Sigmoid. Small demo sizes.
    batch, input_dim, hidden_dim, output_dim = 8, 32, 64, 16

    key = jax.random.PRNGKey(0)
    kx, k1, kb1, k2, kb2 = jax.random.split(key, 5)

    x = jax.random.normal(kx, (batch, input_dim), dtype=jnp.float32)

    # Deterministic param init (mimics Linear's U(-1/sqrt(fan_in), 1/sqrt(fan_in))).
    bound1 = 1.0 / (input_dim ** 0.5)
    w1 = jax.random.uniform(k1, (input_dim, hidden_dim), jnp.float32, -bound1, bound1)
    b1 = jax.random.uniform(kb1, (hidden_dim,), jnp.float32, -bound1, bound1)

    bound2 = 1.0 / (hidden_dim ** 0.5)
    w2 = jax.random.uniform(k2, (hidden_dim, output_dim), jnp.float32, -bound2, bound2)
    b2 = jax.random.uniform(kb2, (output_dim,), jnp.float32, -bound2, bound2)

    out = logistic_regression_forward(x, w1, b1, w2, b2)
    out = jax.block_until_ready(out)

    # Reference in plain JAX at HIGHEST matmul precision (so the reference is
    # not bf16-truncated). Kernel uses exact sigmoid, so tolerance is tight.
    hp = jax.lax.Precision.HIGHEST
    hidden = jnp.maximum(jnp.dot(x, w1, precision=hp) + b1, 0.0)
    ref = jax.nn.sigmoid(jnp.dot(hidden, w2, precision=hp) + b2)

    assert out.shape == (batch, output_dim)
    max_err = float(jnp.max(jnp.abs(out - ref)))
    assert jnp.allclose(out, ref, atol=1e-3, rtol=1e-3), max_err

    print("KERNEL_OK")
</pallas_src>

<mosaic_0001>
module attributes {stable_mosaic.version = 11 : i64} {
  func.func @_mlp_kernel(%arg0: i32, %arg1: memref<8x32xf32, #tpu.memory_space<vmem>>, %arg2: memref<32x128xf32, #tpu.memory_space<vmem>>, %arg3: memref<1x128xf32, #tpu.memory_space<vmem>>, %arg4: memref<128x16xf32, #tpu.memory_space<vmem>>, %arg5: memref<1x16xf32, #tpu.memory_space<vmem>>, %arg6: memref<8x16xf32, #tpu.memory_space<vmem>>) attributes {dimension_semantics = [#tpu.dimension_semantics<parallel>], iteration_bounds = array<i64: 1>, scalar_prefetch = 0 : i64, scratch_operands = 0 : i64, tpu.core_type = #tpu.core_type<tc>, window_params = [{transform_indices = @transform_0, window_bounds = array<i64: 8, 32>}, {pipeline_mode = #tpu.pipeline_mode<synchronous>, transform_indices = @transform_1, window_bounds = array<i64: 32, 128>}, {pipeline_mode = #tpu.pipeline_mode<synchronous>, transform_indices = @transform_2, window_bounds = array<i64: 1, 128>}, {pipeline_mode = #tpu.pipeline_mode<synchronous>, transform_indices = @transform_3, window_bounds = array<i64: 128, 16>}, {pipeline_mode = #tpu.pipeline_mode<synchronous>, transform_indices = @transform_4, window_bounds = array<i64: 1, 16>}, {transform_indices = @transform_5, window_bounds = array<i64: 8, 16>}]} {
    %c0 = arith.constant 0 : index
    %c0_0 = arith.constant 0 : index
    %0 = vector.load %arg1[%c0, %c0_0] : memref<8x32xf32, #tpu.memory_space<vmem>>, vector<8x32xf32>
    %c0_1 = arith.constant 0 : index
    %c0_2 = arith.constant 0 : index
    %1 = vector.load %arg2[%c0_1, %c0_2] : memref<32x128xf32, #tpu.memory_space<vmem>>, vector<32x128xf32>
    %cst = arith.constant dense<0.000000e+00> : vector<8x128xf32>
    %2 = tpu.matmul %0, %1, %cst {dimension_numbers = #tpu.dot_dimension_numbers<[1], [0], [0], [1], [0, 0, 1, 1], [], []>} : vector<8x32xf32>, vector<32x128xf32>, vector<8x128xf32> -> vector<8x128xf32>
    %c0_3 = arith.constant 0 : index
    %c0_4 = arith.constant 0 : index
    %3 = vector.load %arg3[%c0_3, %c0_4] : memref<1x128xf32, #tpu.memory_space<vmem>>, vector<1x128xf32>
    %4 = vector.broadcast %3 : vector<1x128xf32> to vector<8x128xf32>
    %5 = arith.addf %2, %4 : vector<8x128xf32>
    %cst_5 = arith.constant 0.000000e+00 : f32
    %6 = vector.broadcast %cst_5 : f32 to vector<8x128xf32>
    %7 = arith.maximumf %5, %6 : vector<8x128xf32>
    %c0_6 = arith.constant 0 : index
    %c0_7 = arith.constant 0 : index
    %8 = vector.load %arg4[%c0_6, %c0_7] : memref<128x16xf32, #tpu.memory_space<vmem>>, vector<128x16xf32>
    %cst_8 = arith.constant dense<0.000000e+00> : vector<8x16xf32>
    %9 = tpu.matmul %7, %8, %cst_8 {dimension_numbers = #tpu.dot_dimension_numbers<[1], [0], [0], [1], [0, 0, 1, 1], [], []>} : vector<8x128xf32>, vector<128x16xf32>, vector<8x16xf32> -> vector<8x16xf32>
    %c0_9 = arith.constant 0 : index
    %c0_10 = arith.constant 0 : index
    %10 = vector.load %arg5[%c0_9, %c0_10] : memref<1x16xf32, #tpu.memory_space<vmem>>, vector<1x16xf32>
    %11 = vector.broadcast %10 : vector<1x16xf32> to vector<8x16xf32>
    %12 = arith.addf %9, %11 : vector<8x16xf32>
    %cst_11 = arith.constant 0.000000e+00 : f32
    %13 = vector.broadcast %cst_11 : f32 to vector<8x16xf32>
    %14 = arith.subf %13, %12 : vector<8x16xf32>
    %15 = math.exp %14 : vector<8x16xf32>
    %cst_12 = arith.constant 1.000000e+00 : f32
    %16 = vector.broadcast %cst_12 : f32 to vector<8x16xf32>
    %17 = arith.addf %16, %15 : vector<8x16xf32>
    %cst_13 = arith.constant 1.000000e+00 : f32
    %18 = vector.broadcast %cst_13 : f32 to vector<8x16xf32>
    %19 = arith.divf %18, %17 : vector<8x16xf32>
    %c0_14 = arith.constant 0 : index
    %c0_15 = arith.constant 0 : index
    %20 = vector.load %arg6[%c0_14, %c0_15] : memref<8x16xf32, #tpu.memory_space<vmem>>, vector<8x16xf32>
    tpu.vector_store %arg6[%c0_14, %c0_15], %19 {strides = array<i32>} : memref<8x16xf32, #tpu.memory_space<vmem>>, vector<8x16xf32>,
    return
  }
  func.func @transform_0(%arg0: i32) -> (i32, i32) {
    %c0_i32 = arith.constant 0 : i32
    %c0_i32_0 = arith.constant 0 : i32
    return %arg0, %c0_i32 : i32, i32
  }
  func.func @transform_1(%arg0: i32) -> (i32, i32) {
    %c0_i32 = arith.constant 0 : i32
    %c0_i32_0 = arith.constant 0 : i32
    %c0_i32_1 = arith.constant 0 : i32
    return %c0_i32, %c0_i32_0 : i32, i32
  }
  func.func @transform_2(%arg0: i32) -> (i32, i32) {
    %c0_i32 = arith.constant 0 : i32
    %c0_i32_0 = arith.constant 0 : i32
    %c0_i32_1 = arith.constant 0 : i32
    return %c0_i32, %c0_i32_0 : i32, i32
  }
  func.func @transform_3(%arg0: i32) -> (i32, i32) {
    %c0_i32 = arith.constant 0 : i32
    %c0_i32_0 = arith.constant 0 : i32
    %c0_i32_1 = arith.constant 0 : i32
    return %c0_i32, %c0_i32_0 : i32, i32
  }
  func.func @transform_4(%arg0: i32) -> (i32, i32) {
    %c0_i32 = arith.constant 0 : i32
    %c0_i32_0 = arith.constant 0 : i32
    %c0_i32_1 = arith.constant 0 : i32
    return %c0_i32, %c0_i32_0 : i32, i32
  }
  func.func @transform_5(%arg0: i32) -> (i32, i32) {
    %c0_i32 = arith.constant 0 : i32
    %c0_i32_0 = arith.constant 0 : i32
    return %arg0, %c0_i32 : i32, i32
  }
}

</mosaic_0001>

<llo_original>
// kernel: tpu_custom_call.1
$region0: #{tpu_custom_call.1}
  #allocation0 [shape = 'u32[]', space=smem, size = 0x4, offset = 0x4, fixed_abs, tag = 'smem constant byte address 0x4 - core index']
  #allocation1 [shape = 'u32[72,128]{1,0:T(1,128)}', space=vmem, size = 0x9000, scoped, tag = 'internal scratch']
  %s0 = inlined_call_operand.vmem [shape: f32[8,32], index: 0, kind: input, shape index: {}]
  %s1 = inlined_call_operand.vmem [shape: f32[32,128], index: 1, kind: input, shape index: {}]
  %s2 = inlined_call_operand.vmem [shape: f32[1,128], index: 2, kind: input, shape index: {}]
  %s3 = inlined_call_operand.vmem [shape: f32[128,16], index: 3, kind: input, shape index: {}]
  %s4 = inlined_call_operand.vmem [shape: f32[1,16], index: 4, kind: input, shape index: {}]
  %s5 = inlined_call_operand.hbm [shape: f32[8,16], index: 5, kind: output, shape index: {}]
  %s6 = sld [smem:[#allocation0]]
  $region30: #{tpu_custom_call.1} parent=0
    _
  %s8 = ssub.s32 1, %s6
  %s9 = scalar_select 0, %s8, %s6
  $region1: #{tpu_custom_call.1} parent=0
    #allocation2 [shape = 'u8[4096]{0}', space=vmem, size = 0x1000, scoped, tag = 'output window, operand 0, single buffered']
    #allocation3 [shape = 's32[1]{0}', space=sflag, size = 0x4, scoped, tag = 'scoped memory for tpu_custom_call.1']
    %10 = vsyncpa [#allocation3], 0
    // Predicated region
    $region2: #{tpu_custom_call.1} parent=1 // pred_check
      _
    $region3: #{tpu_custom_call.1} parent=1 // pred_check_branch
      %12 = sbr.rel (0) target = $region5
    $region4: #{tpu_custom_call.1} parent=1 // pred_region
      _
    $region5: #{tpu_custom_call.1} parent=1 // pred_fallthru
      _
    // Predicated region
    $region6: #{tpu_custom_call.1} parent=1 // pred_check
      _
    $region7: #{tpu_custom_call.1} parent=1 // pred_check_branch
      %14 = sbr.rel (0) target = $region9
    $region8: #{tpu_custom_call.1} parent=1 // pred_region
      _
    $region9: #{tpu_custom_call.1} parent=1 // pred_fallthru
      _
    // Predicated region
    $region10: #{tpu_custom_call.1} parent=1 // pred_check
      _
    $region11: #{tpu_custom_call.1} parent=1 // pred_check_branch
      %16 = sbr.rel (0) target = $region13
    $region12: #{tpu_custom_call.1} parent=1 // pred_region
      _
    $region13: #{tpu_custom_call.1} parent=1 // pred_fallthru
      _
    // Predicated region
    $region14: #{tpu_custom_call.1} parent=1 // pred_check
      _
    $region15: #{tpu_custom_call.1} parent=1 // pred_check_branch
      %18 = sbr.rel (0) target = $region17
    $region16: #{tpu_custom_call.1} parent=1 // pred_region
      _
    $region17: #{tpu_custom_call.1} parent=1 // pred_fallthru
      _
    // Predicated region
    $region18: #{tpu_custom_call.1} parent=1 // pred_check
      _
    $region19: #{tpu_custom_call.1} parent=1 // pred_check_branch
      %20 = sbr.rel (0) target = $region21
    $region20: #{tpu_custom_call.1} parent=1 // pred_region
      _
    $region21: #{tpu_custom_call.1} parent=1 // pred_fallthru
      _
    %v21 = vld [vmem:[%s0] sm:$0xff]
    %v22 = vld [vmem:[%s1] sm:$0xff]
    %v23 = vld [vmem:[%s1 + $0x8] sm:$0xff]
    %v24 = vld [vmem:[%s1 + $0x10] sm:$0xff]
    %v25 = vld [vmem:[%s1 + $0x18] sm:$0xff]
    %v26 = vld [vmem:[%s2] sm:$0x1]
    %v28 = vperm.slane %v26, 0
    %vm30 = vcmask 261120
    %v32 = vsel %vm30, %v21, 0
    %34 = vmatpush.msra.mxu0 0.0
    %35 = vmatpush.msra.mxu0 0.0
    %36 = vmatpush.msra.mxu0 0.0
    %37 = vmatpush.msra.mxu0 0.0
    %38 = vmatpush.msra.mxu0 0.0
    %39 = vmatpush.msra.mxu0 0.0
    %40 = vmatpush.msra.mxu0 0.0
    %41 = vmatpush.msra.mxu0 0.0
    %42 = vmatpush.msra.mxu0 0.0
    %43 = vmatpush.msra.mxu0 0.0
    %44 = vmatpush.msra.mxu0 0.0
    %45 = vmatpush.msra.mxu0 0.0
    %46 = vmatpush.msra.mxu0 %v25
    %47 = vmatpush.msra.mxu0 %v24
    %48 = vmatpush.msra.mxu0 %v23
    %49 = vmatpush.msra.mxu0 %v22
    %50 = vmatmul.f32.gmra.mxu0 %v32
    %v51 = vpop.f32.mrf.mxu0
    %v52 = vadd.f32 %v28, %v51
    %53 = vdwg.mxu0
    %v54 = vmax.f32 %v52, 0.0
    %v55 = vld [vmem:[%s3] sm:$0xff]
    %v56 = vld [vmem:[%s3 + $0x8] sm:$0xff]
    %v57 = vld [vmem:[%s3 + $0x10] sm:$0xff]
    %v58 = vld [vmem:[%s3 + $0x18] sm:$0xff]
    %v59 = vld [vmem:[%s3 + $0x20] sm:$0xff]
    %v60 = vld [vmem:[%s3 + $0x28] sm:$0xff]
    %v61 = vld [vmem:[%s3 + $0x30] sm:$0xff]
    %v62 = vld [vmem:[%s3 + $0x38] sm:$0xff]
    %v63 = vld [vmem:[%s3 + $0x40] sm:$0xff]
    %v64 = vld [vmem:[%s3 + $0x48] sm:$0xff]
    %v65 = vld [vmem:[%s3 + $0x50] sm:$0xff]
    %v66 = vld [vmem:[%s3 + $0x58] sm:$0xff]
    %v67 = vld [vmem:[%s3 + $0x60] sm:$0xff]
    %v68 = vld [vmem:[%s3 + $0x68] sm:$0xff]
    %v69 = vld [vmem:[%s3 + $0x70] sm:$0xff]
    %v70 = vld [vmem:[%s3 + $0x78] sm:$0xff]
    %v71 = vld [vmem:[%s4] sm:$0x1]
    %v73 = vperm.slane %v71, 0
    %75 = vmatpush.msra.mxu0 %v70
    %76 = vmatpush.msra.mxu0 %v69
    %77 = vmatpush.msra.mxu0 %v68
    %78 = vmatpush.msra.mxu0 %v67
    %79 = vmatpush.msra.mxu0 %v66
    %80 = vmatpush.msra.mxu0 %v65
    %81 = vmatpush.msra.mxu0 %v64
    %82 = vmatpush.msra.mxu0 %v63
    %83 = vmatpush.msra.mxu0 %v62
    %84 = vmatpush.msra.mxu0 %v61
    %85 = vmatpush.msra.mxu0 %v60
    %86 = vmatpush.msra.mxu0 %v59
    %87 = vmatpush.msra.mxu0 %v58
    %88 = vmatpush.msra.mxu0 %v57
    %89 = vmatpush.msra.mxu0 %v56
    %90 = vmatpush.msra.mxu0 %v55
    %91 = vmatmul.f32.gmra.mxu0 %v54
    %v92 = vpop.f32.mrf.mxu0
    %v93 = vadd.f32 %v73, %v92
    %94 = vdwg.mxu0
    %v95 = vsub.f32 0.0, %v93
    %v96 = vmul.f32 %v95, 1.442695
    %v97 = vpow.pop %v96
    %v98 = vadd.f32 %v97, 1.0
    %v99 = vrcp.pop %v98
    %v100 = vmul.f32 %v98, %v99
    %v101 = vsub.f32 1.0, %v100
    %v102 = vmul.f32 %v99, %v101
    %v103 = vadd.f32 %v99, %v102
    %vm104 = vweird.f32 %v98
    %vm105 = vweird.f32 %v99
    %vm106 = vmor %vm104, %vm105
    %v107 = vsel %vm106, %v99, %v103
    %v108 = vand.u32 2147483647, %v98
    %vm109 = vcmp.eq.f32.partialorder %v108, 8.507059e+37
    %v110 = vand.u32 %v98, 2147483648
    %v111 = vor.u32 1.1754944e-38, %v110
    %v112 = vsel %vm109, %v111, %v107
    %v113 = vmul.f32 1.0, %v112
    %vm114 = vcmask 130048
    %115 = vst.msk [vmem:[#allocation2] sm:$0xff] %vm114, %v113
    // Predicated region
    $region22: #{tpu_custom_call.1} parent=1 // pred_check
      _
    $region23: #{tpu_custom_call.1} parent=1 // pred_check_branch
      %117 = sbr.rel (0) target = $region25
    $region24: #{tpu_custom_call.1} parent=1 // pred_region
      %119 = vsyncadd [#allocation3], 0
      %s121 = sshll.u32 [#allocation2], 4
      %s122 = int_to_ptr.vmem [resolvable:$true] %s121
      %s123 = sshll.u32 %s5, 4
      %s124 = int_to_ptr.hbm [resolvable:$true] %s123
      %126 = dma.vmem_to_hbm [thread:$0]  %s122, 128, %s124, [#allocation3]
    $region25: #{tpu_custom_call.1} parent=1 // pred_fallthru
      _
    // Predicated region
    $region26: #{tpu_custom_call.1} parent=1 // pred_check
      _
    $region27: #{tpu_custom_call.1} parent=1 // pred_check_branch
      %128 = sbr.rel (0) target = $region29
    $region28: #{tpu_custom_call.1} parent=1 // pred_region
      %130 = dma.done [#allocation3], 128
    $region29: #{tpu_custom_call.1} parent=1 // pred_fallthru
      _
    %131 = vsyncpa [#allocation3], 1

</llo_original>
